<compile_context>
chip_gen: v6e
topology: v6e:2x2x1
jax: 0.10.0
libtpu: 0.0.40
codegen_flags: <defaults>
</compile_context>

<pallas_src>
import jax
import jax.numpy as jnp
from jax.experimental import pallas as pl
from jax.experimental.pallas import tpu as pltpu


def _multipathway_kernel(
    x1_ref, m1_ref, x2_ref, m2_ref,
    w1_ref, w2_ref, wf_ref, bias_ref,
    o_ref,
):
    # ---- Masked temporal avg-pool (both pathways) ---------------------------
    x1 = x1_ref[...]                                     # (bb, T, D1) f32
    m1 = m1_ref[...]                                     # (bb, T)     f32
    sum1 = jnp.sum(x1 * m1[:, :, None], axis=1)          # (bb, D1)
    inv1 = pl.reciprocal(                                # EUP approximate rcp
        jnp.maximum(jnp.sum(m1, axis=1, keepdims=True), 1.0), approx=True)
    pooled1 = sum1 * inv1                                # (bb, D1)

    x2 = x2_ref[...]                                     # (bb, T, D2)
    m2 = m2_ref[...]                                     # (bb, T)
    sum2 = jnp.sum(x2 * m2[:, :, None], axis=1)          # (bb, D2)
    inv2 = pl.reciprocal(
        jnp.maximum(jnp.sum(m2, axis=1, keepdims=True), 1.0), approx=True)
    pooled2 = sum2 * inv2                                # (bb, D2)

    # ---- Per-pathway Linear (D_i -> Hp) + ReLU (Hp = 128, lane-dense) -------
    h1 = jnp.maximum(
        jnp.dot(pooled1, w1_ref[...], preferred_element_type=jnp.float32)
        + bias_ref[0:1, :], 0.0)                         # (bb, Hp)
    h2 = jnp.maximum(
        jnp.dot(pooled2, w2_ref[...], preferred_element_type=jnp.float32)
        + bias_ref[1:2, :], 0.0)                         # (bb, Hp)

    # ---- Fusion: single matmul on the 128-lane-aligned concat ---------------
    h_cat = jnp.concatenate([h1, h2], axis=-1)           # (bb, 2*Hp)
    fused = (jnp.dot(h_cat, wf_ref[...], preferred_element_type=jnp.float32)
             + bias_ref[2:3, :])                         # (bb, Hp)
    o_ref[...] = fused.astype(o_ref.dtype)


def _choose_block_b(batch):
    """Largest batch tile keeping >=2 parallel grid steps (v7x has 2 TCs)."""
    if batch % 2 == 0 and batch > 8:
        bb = batch // 2
    else:
        bb = batch
    while bb > 256 and bb % 2 == 0:   # keep per-step VMEM modest on v7x
        bb //= 2
    return bb


def masked_multipathway(x1, m1, x2, m2, params, *, block_b=None):
    """Fused MaskedMultiPathWay forward as a single Pallas kernel."""
    B, T, D1 = x1.shape
    _, _, D2 = x2.shape
    H = params["b1"].shape[-1]
    if block_b is None:
        block_b = _choose_block_b(B)
    assert B % block_b == 0

    # Pad hidden dim up to a full lane width for lane-dense stores.
    Hp = ((H + 127) // 128) * 128

    f32 = jnp.float32
    w1 = params["w1"].astype(f32)
    w2 = params["w2"].astype(f32)
    wf = params["wf"].astype(f32)
    b1 = params["b1"].reshape(-1).astype(f32)
    b2 = params["b2"].reshape(-1).astype(f32)
    bf = params["bf"].reshape(-1).astype(f32)

    # Zero-pad H -> Hp and pack the small parameters (layout plumbing only).
    w1p = jnp.zeros((D1, Hp), f32).at[:, :H].set(w1)
    w2p = jnp.zeros((D2, Hp), f32).at[:, :H].set(w2)
    wfp = (jnp.zeros((2 * Hp, Hp), f32)
           .at[:H, :H].set(wf[:H])
           .at[Hp:Hp + H, :H].set(wf[H:]))
    bias = (jnp.zeros((3, Hp), f32)
            .at[0, :H].set(b1)
            .at[1, :H].set(b2)
            .at[2, :H].set(bf))

    grid = (B // block_b,)
    batch3 = lambda i: (i, 0, 0)
    batch2 = lambda i: (i, 0)
    const2 = lambda i: (0, 0)

    # TODO(synk): if T/D scale up, set vmem_limit_bytes and cap block_b for
    # v7x's 64 MiB physical VMEM.
    out = pl.pallas_call(
        _multipathway_kernel,
        out_shape=jax.ShapeDtypeStruct((B, Hp), f32),
        grid_spec=pltpu.PrefetchScalarGridSpec(
            num_scalar_prefetch=0,
            grid=grid,
            in_specs=[
                pl.BlockSpec((block_b, T, D1), batch3),   # x1
                pl.BlockSpec((block_b, T), batch2),       # m1
                pl.BlockSpec((block_b, T, D2), batch3),   # x2
                pl.BlockSpec((block_b, T), batch2),       # m2
                pl.BlockSpec((D1, Hp), const2),           # w1 (H padded)
                pl.BlockSpec((D2, Hp), const2),           # w2 (H padded)
                pl.BlockSpec((2 * Hp, Hp), const2),       # packed fusion weight
                pl.BlockSpec((3, Hp), const2),            # packed [b1; b2; bf]
            ],
            out_specs=pl.BlockSpec((block_b, Hp), batch2),
        ),
        compiler_params=pltpu.CompilerParams(
            dimension_semantics=("parallel",)),
    )(x1, m1, x2, m2, w1p, w2p, wfp, bias)

    return out[:, :H]


def _reference(x1, m1, x2, m2, params):
    """Pure-JAX reference of the same forward semantics (for validation)."""
    def pathway(x, m, w, b):
        xm = x * m[:, :, None]
        pooled = xm.sum(axis=1) / jnp.maximum(m.sum(axis=1, keepdims=True), 1.0)
        return jax.nn.relu(pooled @ w + b)

    h1 = pathway(x1, m1, params["w1"], params["b1"])
    h2 = pathway(x2, m2, params["w2"], params["b2"])
    cat = jnp.concatenate([h1, h2], axis=-1)
    return cat @ params["wf"] + params["bf"]


if __name__ == "__main__":
    # 2 pathways, batch=16 (two parallel grid tiles of 8), seq=8,
    # pathway feature dims 32 / 48, hidden=32.
    B, T, D1, D2, H = 16, 8, 32, 48, 32

    key = jax.random.PRNGKey(0)
    (k_x1, k_x2, k_len1, k_len2, k_w1, k_b1, k_w2, k_b2, k_wf, k_bf
     ) = jax.random.split(key, 10)

    x1 = jax.random.normal(k_x1, (B, T, D1), dtype=jnp.float32)
    x2 = jax.random.normal(k_x2, (B, T, D2), dtype=jnp.float32)

    # Variable-length valid prefixes -> boolean masks -> float32 masks.
    len1 = jax.random.randint(k_len1, (B,), 1, T + 1)
    len2 = jax.random.randint(k_len2, (B,), 1, T + 1)
    t_idx = jnp.arange(T)[None, :]
    m1 = (t_idx < len1[:, None]).astype(jnp.float32)
    m2 = (t_idx < len2[:, None]).astype(jnp.float32)

    scale = 0.05
    params = {
        "w1": scale * jax.random.normal(k_w1, (D1, H), dtype=jnp.float32),
        "b1": scale * jax.random.normal(k_b1, (1, H), dtype=jnp.float32),
        "w2": scale * jax.random.normal(k_w2, (D2, H), dtype=jnp.float32),
        "b2": scale * jax.random.normal(k_b2, (1, H), dtype=jnp.float32),
        "wf": scale * jax.random.normal(k_wf, (2 * H, H), dtype=jnp.float32),
        "bf": scale * jax.random.normal(k_bf, (1, H), dtype=jnp.float32),
    }

    run = jax.jit(masked_multipathway)
    out = jax.block_until_ready(run(x1, m1, x2, m2, params))

    ref = _reference(x1, m1, x2, m2, params)
    # approx reciprocal (EUP) introduces ~1e-4 relative deviation -> 2e-3 tol.
    if not jnp.allclose(out, ref, atol=2e-3, rtol=2e-3):
        raise AssertionError("Pallas output does not match JAX reference")

    print("KERNEL_OK")
</pallas_src>

<mosaic_0001>
module attributes {stable_mosaic.version = 11 : i64} {
  func.func @_multipathway_kernel(%arg0: i32, %arg1: memref<8x8x32xf32, #tpu.memory_space<vmem>>, %arg2: memref<8x8xf32, #tpu.memory_space<vmem>>, %arg3: memref<8x8x48xf32, #tpu.memory_space<vmem>>, %arg4: memref<8x8xf32, #tpu.memory_space<vmem>>, %arg5: memref<32x128xf32, #tpu.memory_space<vmem>>, %arg6: memref<48x128xf32, #tpu.memory_space<vmem>>, %arg7: memref<256x128xf32, #tpu.memory_space<vmem>>, %arg8: memref<3x128xf32, #tpu.memory_space<vmem>>, %arg9: memref<8x128xf32, #tpu.memory_space<vmem>>) attributes {dimension_semantics = [#tpu.dimension_semantics<parallel>], iteration_bounds = array<i64: 2>, scalar_prefetch = 0 : i64, scratch_operands = 0 : i64, tpu.core_type = #tpu.core_type<tc>, window_params = [{transform_indices = @transform_0, window_bounds = array<i64: 8, 8, 32>}, {transform_indices = @transform_1, window_bounds = array<i64: 8, 8>}, {transform_indices = @transform_2, window_bounds = array<i64: 8, 8, 48>}, {transform_indices = @transform_3, window_bounds = array<i64: 8, 8>}, {pipeline_mode = #tpu.pipeline_mode<synchronous>, transform_indices = @transform_4, window_bounds = array<i64: 32, 128>}, {pipeline_mode = #tpu.pipeline_mode<synchronous>, transform_indices = @transform_5, window_bounds = array<i64: 48, 128>}, {pipeline_mode = #tpu.pipeline_mode<synchronous>, transform_indices = @transform_6, window_bounds = array<i64: 256, 128>}, {pipeline_mode = #tpu.pipeline_mode<synchronous>, transform_indices = @transform_7, window_bounds = array<i64: 3, 128>}, {transform_indices = @transform_8, window_bounds = array<i64: 8, 128>}]} {
    %c0 = arith.constant 0 : index
    %c0_0 = arith.constant 0 : index
    %c0_1 = arith.constant 0 : index
    %0 = vector.load %arg1[%c0, %c0_0, %c0_1] : memref<8x8x32xf32, #tpu.memory_space<vmem>>, vector<8x8x32xf32>
    %c0_2 = arith.constant 0 : index
    %c0_3 = arith.constant 0 : index
    %1 = vector.load %arg2[%c0_2, %c0_3] : memref<8x8xf32, #tpu.memory_space<vmem>>, vector<8x8xf32>
    %2 = vector.shape_cast %1 : vector<8x8xf32> to vector<8x8x1xf32>
    %3 = vector.broadcast %2 : vector<8x8x1xf32> to vector<8x8x32xf32>
    %4 = arith.mulf %0, %3 : vector<8x8x32xf32>
    %cst = arith.constant dense<0.000000e+00> : vector<8x32xf32>
    %5 = vector.multi_reduction <add>, %4, %cst [1] : vector<8x8x32xf32> to vector<8x32xf32>
    %cst_4 = arith.constant dense<0.000000e+00> : vector<8xf32>
    %6 = vector.multi_reduction <add>, %1, %cst_4 [1] : vector<8x8xf32> to vector<8xf32>
    %7 = vector.shape_cast %6 : vector<8xf32> to vector<8x1xf32>
    %cst_5 = arith.constant 1.000000e+00 : f32
    %8 = vector.broadcast %cst_5 : f32 to vector<8x1xf32>
    %9 = arith.maximumf %7, %8 : vector<8x1xf32>
    %10 = tpu.reciprocal %9 {approx = true} : vector<8x1xf32> -> vector<8x1xf32>
    %11 = vector.broadcast %10 : vector<8x1xf32> to vector<8x32xf32>
    %12 = arith.mulf %5, %11 : vector<8x32xf32>
    %c0_6 = arith.constant 0 : index
    %c0_7 = arith.constant 0 : index
    %c0_8 = arith.constant 0 : index
    %13 = vector.load %arg3[%c0_6, %c0_7, %c0_8] : memref<8x8x48xf32, #tpu.memory_space<vmem>>, vector<8x8x48xf32>
    %c0_9 = arith.constant 0 : index
    %c0_10 = arith.constant 0 : index
    %14 = vector.load %arg4[%c0_9, %c0_10] : memref<8x8xf32, #tpu.memory_space<vmem>>, vector<8x8xf32>
    %15 = vector.shape_cast %14 : vector<8x8xf32> to vector<8x8x1xf32>
    %16 = vector.broadcast %15 : vector<8x8x1xf32> to vector<8x8x48xf32>
    %17 = arith.mulf %13, %16 : vector<8x8x48xf32>
    %cst_11 = arith.constant dense<0.000000e+00> : vector<8x48xf32>
    %18 = vector.multi_reduction <add>, %17, %cst_11 [1] : vector<8x8x48xf32> to vector<8x48xf32>
    %cst_12 = arith.constant dense<0.000000e+00> : vector<8xf32>
    %19 = vector.multi_reduction <add>, %14, %cst_12 [1] : vector<8x8xf32> to vector<8xf32>
    %20 = vector.shape_cast %19 : vector<8xf32> to vector<8x1xf32>
    %cst_13 = arith.constant 1.000000e+00 : f32
    %21 = vector.broadcast %cst_13 : f32 to vector<8x1xf32>
    %22 = arith.maximumf %20, %21 : vector<8x1xf32>
    %23 = tpu.reciprocal %22 {approx = true} : vector<8x1xf32> -> vector<8x1xf32>
    %24 = vector.broadcast %23 : vector<8x1xf32> to vector<8x48xf32>
    %25 = arith.mulf %18, %24 : vector<8x48xf32>
    %c0_14 = arith.constant 0 : index
    %c0_15 = arith.constant 0 : index
    %26 = vector.load %arg5[%c0_14, %c0_15] : memref<32x128xf32, #tpu.memory_space<vmem>>, vector<32x128xf32>
    %cst_16 = arith.constant dense<0.000000e+00> : vector<8x128xf32>
    %27 = tpu.matmul %12, %26, %cst_16 {dimension_numbers = #tpu.dot_dimension_numbers<[1], [0], [0], [1], [0, 0, 1, 1], [], []>} : vector<8x32xf32>, vector<32x128xf32>, vector<8x128xf32> -> vector<8x128xf32>
    %c0_17 = arith.constant 0 : index
    %c0_18 = arith.constant 0 : index
    %28 = vector.load %arg8[%c0_17, %c0_18] : memref<3x128xf32, #tpu.memory_space<vmem>>, vector<1x128xf32>
    %29 = vector.broadcast %28 : vector<1x128xf32> to vector<8x128xf32>
    %30 = arith.addf %27, %29 : vector<8x128xf32>
    %cst_19 = arith.constant 0.000000e+00 : f32
    %31 = vector.broadcast %cst_19 : f32 to vector<8x128xf32>
    %32 = arith.maximumf %30, %31 : vector<8x128xf32>
    %c0_20 = arith.constant 0 : index
    %c0_21 = arith.constant 0 : index
    %33 = vector.load %arg6[%c0_20, %c0_21] : memref<48x128xf32, #tpu.memory_space<vmem>>, vector<48x128xf32>
    %cst_22 = arith.constant dense<0.000000e+00> : vector<8x128xf32>
    %34 = tpu.matmul %25, %33, %cst_22 {dimension_numbers = #tpu.dot_dimension_numbers<[1], [0], [0], [1], [0, 0, 1, 1], [], []>} : vector<8x48xf32>, vector<48x128xf32>, vector<8x128xf32> -> vector<8x128xf32>
    %c1 = arith.constant 1 : index
    %c0_23 = arith.constant 0 : index
    %35 = vector.load %arg8[%c1, %c0_23] : memref<3x128xf32, #tpu.memory_space<vmem>>, vector<1x128xf32>
    %36 = vector.broadcast %35 : vector<1x128xf32> to vector<8x128xf32>
    %37 = arith.addf %34, %36 : vector<8x128xf32>
    %cst_24 = arith.constant 0.000000e+00 : f32
    %38 = vector.broadcast %cst_24 : f32 to vector<8x128xf32>
    %39 = arith.maximumf %37, %38 : vector<8x128xf32>
    %40 = tpu.concatenate %32, %39 in 1 : vector<8x128xf32>, vector<8x128xf32> -> vector<8x256xf32>
    %c0_25 = arith.constant 0 : index
    %c0_26 = arith.constant 0 : index
    %41 = vector.load %arg7[%c0_25, %c0_26] : memref<256x128xf32, #tpu.memory_space<vmem>>, vector<256x128xf32>
    %cst_27 = arith.constant dense<0.000000e+00> : vector<8x128xf32>
    %42 = tpu.matmul %40, %41, %cst_27 {dimension_numbers = #tpu.dot_dimension_numbers<[1], [0], [0], [1], [0, 0, 1, 1], [], []>} : vector<8x256xf32>, vector<256x128xf32>, vector<8x128xf32> -> vector<8x128xf32>
    %c2 = arith.constant 2 : index
    %c0_28 = arith.constant 0 : index
    %43 = vector.load %arg8[%c2, %c0_28] : memref<3x128xf32, #tpu.memory_space<vmem>>, vector<1x128xf32>
    %44 = vector.broadcast %43 : vector<1x128xf32> to vector<8x128xf32>
    %45 = arith.addf %42, %44 : vector<8x128xf32>
    %c0_29 = arith.constant 0 : index
    %c0_30 = arith.constant 0 : index
    %46 = vector.load %arg9[%c0_29, %c0_30] : memref<8x128xf32, #tpu.memory_space<vmem>>, vector<8x128xf32>
    tpu.vector_store %arg9[%c0_29, %c0_30], %45 {strides = array<i32>} : memref<8x128xf32, #tpu.memory_space<vmem>>, vector<8x128xf32>,
    return
  }
  func.func @transform_0(%arg0: i32) -> (i32, i32, i32) {
    %c0_i32 = arith.constant 0 : i32
    %c0_i32_0 = arith.constant 0 : i32
    %c0_i32_1 = arith.constant 0 : i32
    return %arg0, %c0_i32, %c0_i32_0 : i32, i32, i32
  }
  func.func @transform_1(%arg0: i32) -> (i32, i32) {
    %c0_i32 = arith.constant 0 : i32
    %c0_i32_0 = arith.constant 0 : i32
    return %arg0, %c0_i32 : i32, i32
  }
  func.func @transform_2(%arg0: i32) -> (i32, i32, i32) {
    %c0_i32 = arith.constant 0 : i32
    %c0_i32_0 = arith.constant 0 : i32
    %c0_i32_1 = arith.constant 0 : i32
    return %arg0, %c0_i32, %c0_i32_0 : i32, i32, i32
  }
  func.func @transform_3(%arg0: i32) -> (i32, i32) {
    %c0_i32 = arith.constant 0 : i32
    %c0_i32_0 = arith.constant 0 : i32
    return %arg0, %c0_i32 : i32, i32
  }
  func.func @transform_4(%arg0: i32) -> (i32, i32) {
    %c0_i32 = arith.constant 0 : i32
    %c0_i32_0 = arith.constant 0 : i32
    %c0_i32_1 = arith.constant 0 : i32
    return %c0_i32, %c0_i32_0 : i32, i32
  }
  func.func @transform_5(%arg0: i32) -> (i32, i32) {
    %c0_i32 = arith.constant 0 : i32
    %c0_i32_0 = arith.constant 0 : i32
    %c0_i32_1 = arith.constant 0 : i32
    return %c0_i32, %c0_i32_0 : i32, i32
  }
  func.func @transform_6(%arg0: i32) -> (i32, i32) {
    %c0_i32 = arith.constant 0 : i32
    %c0_i32_0 = arith.constant 0 : i32
    %c0_i32_1 = arith.constant 0 : i32
    return %c0_i32, %c0_i32_0 : i32, i32
  }
  func.func @transform_7(%arg0: i32) -> (i32, i32) {
    %c0_i32 = arith.constant 0 : i32
    %c0_i32_0 = arith.constant 0 : i32
    %c0_i32_1 = arith.constant 0 : i32
    return %c0_i32, %c0_i32_0 : i32, i32
  }
  func.func @transform_8(%arg0: i32) -> (i32, i32) {
    %c0_i32 = arith.constant 0 : i32
    %c0_i32_0 = arith.constant 0 : i32
    return %arg0, %c0_i32 : i32, i32
  }
}

</mosaic_0001>

<llo_original>
// kernel: masked_multipathway.1
$region0: #{masked_multipathway.1}
  #allocation0 [shape = 'u32[]', space=smem, size = 0x4, offset = 0x4, fixed_abs, tag = 'smem constant byte address 0x4 - core index']
  #allocation1 [shape = 'u32[144,128]{1,0:T(1,128)}', space=vmem, size = 0x12000, scoped, tag = 'internal scratch']
  %s0 = inlined_call_operand.vmem [shape: f32[16,8,32], index: 0, kind: input, shape index: {}]
  %s1 = inlined_call_operand.vmem [shape: f32[16,8], index: 1, kind: input, shape index: {}]
  %s2 = inlined_call_operand.vmem [shape: f32[16,8,48], index: 2, kind: input, shape index: {}]
  %s3 = inlined_call_operand.vmem [shape: f32[16,8], index: 3, kind: input, shape index: {}]
  %s4 = inlined_call_operand.vmem [shape: f32[32,128], index: 4, kind: input, shape index: {}]
  %s5 = inlined_call_operand.vmem [shape: f32[48,128], index: 5, kind: input, shape index: {}]
  %s6 = inlined_call_operand.vmem [shape: f32[256,128], index: 6, kind: input, shape index: {}]
  %s7 = inlined_call_operand.vmem [shape: f32[3,128], index: 7, kind: input, shape index: {}]
  %s8 = inlined_call_operand.hbm [shape: f32[16,128], index: 8, kind: output, shape index: {}]
  %s9 = sld [smem:[#allocation0]]
  $region65: #{masked_multipathway.1} parent=0
    _
  %s11 = ssub.s32 1, %s9
  %s12 = scalar_select 0, %s11, %s9
  $region1: #{masked_multipathway.1} parent=0
    #allocation2 [shape = 'u8[8192]{0}', space=vmem, size = 0x2000, scoped, tag = 'output window, operand 0']
    #allocation3 [shape = 's32[2]{0}', space=sflag, size = 0x8, scoped, tag = 'scoped memory for masked_multipathway.1']
    %13 = vsyncpa [#allocation3], 0
    %s14 = scalar_lea.sflag [#allocation3], 1
    %15 = vsyncpa %s14, 0
    loop: start=0, step=1, limit=4
    $region2: #{masked_multipathway.1} parent=1 // loop_pre_header
      _
    $region3: #{masked_multipathway.1} parent=1 // loop_header
      %s17 = sphi 0, %s21
      %p18 = scmp.ge.s32.totalorder %s17, 4
      %s27 = sphi 0, %s29
      %s30 = sphi 0, %s27
      %s31 = sphi 0, %s30
      %s47 = sphi 0, %s31
      %s53 = sphi 0, %s55
      %s56 = sphi 0, %s53
      %s57 = sphi 0, %s56
      %s73 = sphi 0, %s57
      %s79 = sphi 0, %s81
      %s82 = sphi 0, %s79
      %s83 = sphi 0, %s82
      %s99 = sphi 0, %s83
      %s105 = sphi 0, %s107
      %s108 = sphi 0, %s105
      %s109 = sphi 0, %s108
      %s125 = sphi 0, %s109
      %s129 = sphi 0, %s129
      %s131 = sphi 0, %s129
      %s132 = sphi 0, %s131
      %s146 = sphi 0, %s132
      %s150 = sphi 0, %s150
      %s152 = sphi 0, %s150
      %s153 = sphi 0, %s152
      %s167 = sphi 0, %s153
      %s171 = sphi 0, %s171
      %s173 = sphi 0, %s171
      %s174 = sphi 0, %s173
      %s188 = sphi 0, %s174
      %s192 = sphi 0, %s192
      %s194 = sphi 0, %s192
      %s195 = sphi 0, %s194
      %s209 = sphi 0, %s195
      %s215 = sphi 0, %s217
      %s218 = sphi 0, %s215
      %s219 = sphi 0, %s218
      %s235 = sphi 0, %s219
    $region4: #{masked_multipathway.1} parent=1 // loop_header_branch
      %20 = sbr.rel (%p18) target = $region8
    $region5: #{masked_multipathway.1} parent=1 // loop_body
      %s22 = ssub.s32 %s17, 1
      %s23 = ssub.s32 %s17, 2
      %s24 = sadd.s32 %s17, 1
      %s25 = ssub.s32 %s17, %s24
      %p26 = scmp.eq.s32.totalorder %s25, 0
      %s28 = sadd.s32 %s27, 1
      %s29 = scalar_select %p26, %s27, %s28
      %p32 = pneg %p26
      %p33 = scmp.eq.s32.totalorder %s17, 1
      %p34 = por %p32, %p33
      %p35 = scmp.ne.s32.totalorder %s27, %s30
      %p36 = scmp.eq.s32.totalorder %s17, 0
      %p37 = por %p35, %p36
      %p38 = scmp.ne.s32.totalorder %s27, %s30
      %p39 = scmp.eq.s32.totalorder %s22, 1
      %p40 = por %p38, %p39
      %p41 = scmp.ne.s32.totalorder %s30, %s31
      %p42 = scmp.eq.s32.totalorder %s22, 0
      %p43 = por %p41, %p42
      %p44 = scmp.ne.s32.totalorder %s30, %s31
      %p45 = scmp.eq.s32.totalorder %s23, 1
      %p46 = por %p44, %p45
      %p48 = scmp.ne.s32.totalorder %s31, %s47
      %p49 = scmp.eq.s32.totalorder %s23, 0
      %p50 = por %p48, %p49
      %s51 = ssub.s32 %s17, %s24
      %p52 = scmp.eq.s32.totalorder %s51, 0
      %s54 = sadd.s32 %s53, 1
      %s55 = scalar_select %p52, %s53, %s54
      %p58 = pneg %p52
      %p59 = scmp.eq.s32.totalorder %s17, 1
      %p60 = por %p58, %p59
      %p61 = scmp.ne.s32.totalorder %s53, %s56
      %p62 = scmp.eq.s32.totalorder %s17, 0
      %p63 = por %p61, %p62
      %p64 = scmp.ne.s32.totalorder %s53, %s56
      %p65 = scmp.eq.s32.totalorder %s22, 1
      %p66 = por %p64, %p65
      %p67 = scmp.ne.s32.totalorder %s56, %s57
      %p68 = scmp.eq.s32.totalorder %s22, 0
      %p69 = por %p67, %p68
      %p70 = scmp.ne.s32.totalorder %s56, %s57
      %p71 = scmp.eq.s32.totalorder %s23, 1
      %p72 = por %p70, %p71
      %p74 = scmp.ne.s32.totalorder %s57, %s73
      %p75 = scmp.eq.s32.totalorder %s23, 0
      %p76 = por %p74, %p75
      %s77 = ssub.s32 %s17, %s24
      %p78 = scmp.eq.s32.totalorder %s77, 0
      %s80 = sadd.s32 %s79, 1
      %s81 = scalar_select %p78, %s79, %s80
      %p84 = pneg %p78
      %p85 = scmp.eq.s32.totalorder %s17, 1
      %p86 = por %p84, %p85
      %p87 = scmp.ne.s32.totalorder %s79, %s82
      %p88 = scmp.eq.s32.totalorder %s17, 0
      %p89 = por %p87, %p88
      %p90 = scmp.ne.s32.totalorder %s79, %s82
      %p91 = scmp.eq.s32.totalorder %s22, 1
      %p92 = por %p90, %p91
      %p93 = scmp.ne.s32.totalorder %s82, %s83
      %p94 = scmp.eq.s32.totalorder %s22, 0
      %p95 = por %p93, %p94
      %p96 = scmp.ne.s32.totalorder %s82, %s83
      %p97 = scmp.eq.s32.totalorder %s23, 1
      %p98 = por %p96, %p97
      %p100 = scmp.ne.s32.totalorder %s83, %s99
      %p101 = scmp.eq.s32.totalorder %s23, 0
      %p102 = por %p100, %p101
      %s103 = ssub.s32 %s17, %s24
      %p104 = scmp.eq.s32.totalorder %s103, 0
      %s106 = sadd.s32 %s105, 1
      %s107 = scalar_select %p104, %s105, %s106
      %p110 = pneg %p104
      %p111 = scmp.eq.s32.totalorder %s17, 1
      %p112 = por %p110, %p111
      %p113 = scmp.ne.s32.totalorder %s105, %s108
      %p114 = scmp.eq.s32.totalorder %s17, 0
      %p115 = por %p113, %p114
      %p116 = scmp.ne.s32.totalorder %s105, %s108
      %p117 = scmp.eq.s32.totalorder %s22, 1
      %p118 = por %p116, %p117
      %p119 = scmp.ne.s32.totalorder %s108, %s109
      %p120 = scmp.eq.s32.totalorder %s22, 0
      %p121 = por %p119, %p120
      %p122 = scmp.ne.s32.totalorder %s108, %s109
      %p123 = scmp.eq.s32.totalorder %s23, 1
      %p124 = por %p122, %p123
      %p126 = scmp.ne.s32.totalorder %s109, %s125
      %p127 = scmp.eq.s32.totalorder %s23, 0
      %p128 = por %p126, %p127
      %s130 = sadd.s32 %s129, 1
      %p133 = scmp.eq.s32.totalorder %s17, 1
      %p134 = scmp.ne.s32.totalorder %s129, %s131
      %p135 = scmp.eq.s32.totalorder %s17, 0
      %p136 = por %p134, %p135
      %p137 = scmp.ne.s32.totalorder %s129, %s131
      %p138 = scmp.eq.s32.totalorder %s22, 1
      %p139 = por %p137, %p138
      %p140 = scmp.ne.s32.totalorder %s131, %s132
      %p141 = scmp.eq.s32.totalorder %s22, 0
      %p142 = por %p140, %p141
      %p143 = scmp.ne.s32.totalorder %s131, %s132
      %p144 = scmp.eq.s32.totalorder %s23, 1
      %p145 = por %p143, %p144
      %p147 = scmp.ne.s32.totalorder %s132, %s146
      %p148 = scmp.eq.s32.totalorder %s23, 0
      %p149 = por %p147, %p148
      %s151 = sadd.s32 %s150, 1
      %p154 = scmp.eq.s32.totalorder %s17, 1
      %p155 = scmp.ne.s32.totalorder %s150, %s152
      %p156 = scmp.eq.s32.totalorder %s17, 0
      %p157 = por %p155, %p156
      %p158 = scmp.ne.s32.totalorder %s150, %s152
      %p159 = scmp.eq.s32.totalorder %s22, 1
      %p160 = por %p158, %p159
      %p161 = scmp.ne.s32.totalorder %s152, %s153
      %p162 = scmp.eq.s32.totalorder %s22, 0
      %p163 = por %p161, %p162
      %p164 = scmp.ne.s32.totalorder %s152, %s153
      %p165 = scmp.eq.s32.totalorder %s23, 1
      %p166 = por %p164, %p165
      %p168 = scmp.ne.s32.totalorder %s153, %s167
      %p169 = scmp.eq.s32.totalorder %s23, 0
      %p170 = por %p168, %p169
      %s172 = sadd.s32 %s171, 1
      %p175 = scmp.eq.s32.totalorder %s17, 1
      %p176 = scmp.ne.s32.totalorder %s171, %s173
      %p177 = scmp.eq.s32.totalorder %s17, 0
      %p178 = por %p176, %p177
      %p179 = scmp.ne.s32.totalorder %s171, %s173
      %p180 = scmp.eq.s32.totalorder %s22, 1
      %p181 = por %p179, %p180
      %p182 = scmp.ne.s32.totalorder %s173, %s174
      %p183 = scmp.eq.s32.totalorder %s22, 0
      %p184 = por %p182, %p183
      %p185 = scmp.ne.s32.totalorder %s173, %s174
      %p186 = scmp.eq.s32.totalorder %s23, 1
      %p187 = por %p185, %p186
      %p189 = scmp.ne.s32.totalorder %s174, %s188
      %p190 = scmp.eq.s32.totalorder %s23, 0
      %p191 = por %p189, %p190
      %s193 = sadd.s32 %s192, 1
      %p196 = scmp.eq.s32.totalorder %s17, 1
      %p197 = scmp.ne.s32.totalorder %s192, %s194
      %p198 = scmp.eq.s32.totalorder %s17, 0
      %p199 = por %p197, %p198
      %p200 = scmp.ne.s32.totalorder %s192, %s194
      %p201 = scmp.eq.s32.totalorder %s22, 1
      %p202 = por %p200, %p201
      %p203 = scmp.ne.s32.totalorder %s194, %s195
      %p204 = scmp.eq.s32.totalorder %s22, 0
      %p205 = por %p203, %p204
      %p206 = scmp.ne.s32.totalorder %s194, %s195
      %p207 = scmp.eq.s32.totalorder %s23, 1
      %p208 = por %p206, %p207
      %p210 = scmp.ne.s32.totalorder %s195, %s209
      %p211 = scmp.eq.s32.totalorder %s23, 0
      %p212 = por %p210, %p211
      %s213 = ssub.s32 %s17, %s24
      %p214 = scmp.eq.s32.totalorder %s213, 0
      %s216 = sadd.s32 %s215, 1
      %s217 = scalar_select %p214, %s215, %s216
      %p220 = pneg %p214
      %p221 = scmp.eq.s32.totalorder %s17, 1
      %p222 = por %p220, %p221
      %p223 = scmp.ne.s32.totalorder %s215, %s218
      %p224 = scmp.eq.s32.totalorder %s17, 0
      %p225 = por %p223, %p224
      %p226 = scmp.ne.s32.totalorder %s215, %s218
      %p227 = scmp.eq.s32.totalorder %s22, 1
      %p228 = por %p226, %p227
      %p229 = scmp.ne.s32.totalorder %s218, %s219
      %p230 = scmp.eq.s32.totalorder %s22, 0
      %p231 = por %p229, %p230
      %p232 = scmp.ne.s32.totalorder %s218, %s219
      %p233 = scmp.eq.s32.totalorder %s23, 1
      %p234 = por %p232, %p233
      %p236 = scmp.ne.s32.totalorder %s219, %s235
      %p237 = scmp.eq.s32.totalorder %s23, 0
      %p238 = por %p236, %p237
      %p239 = scmp.le.s32.totalorder 1, %s17
      %p240 = scmp.lt.s32.totalorder %s17, 3
      %p241 = pnand %p239, %p240
      %p242 = pneg %p241
      // Predicated region
      $region9: #{masked_multipathway.1} parent=5 // pred_check
        _
      $region10: #{masked_multipathway.1} parent=5 // pred_check_branch
        %244 = sbr.rel (%p241) target = $region12
      $region11: #{masked_multipathway.1} parent=5 // pred_region
        %s245 = ssub.s32 %s17, 1
        // Predicated region
        $region13: #{masked_multipathway.1} parent=11 // pred_check
          %p246 = pneg %p142
        $region14: #{masked_multipathway.1} parent=11 // pred_check_branch
          %248 = sbr.rel (%p246) target = $region16
        $region15: #{masked_multipathway.1} parent=11 // pred_region
          _
        $region16: #{masked_multipathway.1} parent=11 // pred_fallthru
          _
        // Predicated region
        $region17: #{masked_multipathway.1} parent=11 // pred_check
          %p249 = pneg %p163
        $region18: #{masked_multipathway.1} parent=11 // pred_check_branch
          %251 = sbr.rel (%p249) target = $region20
        $region19: #{masked_multipathway.1} parent=11 // pred_region
          _
        $region20: #{masked_multipathway.1} parent=11 // pred_fallthru
          _
        // Predicated region
        $region21: #{masked_multipathway.1} parent=11 // pred_check
          %p252 = pneg %p184
        $region22: #{masked_multipathway.1} parent=11 // pred_check_branch
          %254 = sbr.rel (%p252) target = $region24
        $region23: #{masked_multipathway.1} parent=11 // pred_region
          _
        $region24: #{masked_multipathway.1} parent=11 // pred_fallthru
          _
        // Predicated region
        $region25: #{masked_multipathway.1} parent=11 // pred_check
          %p255 = pneg %p205
        $region26: #{masked_multipathway.1} parent=11 // pred_check_branch
          %257 = sbr.rel (%p255) target = $region28
        $region27: #{masked_multipathway.1} parent=11 // pred_region
          _
        $region28: #{masked_multipathway.1} parent=11 // pred_fallthru
          _
      $region12: #{masked_multipathway.1} parent=5 // pred_fallthru
        _
      %p258 = scmp.lt.s32.totalorder %s17, 2
      // Predicated region
      $region29: #{masked_multipathway.1} parent=5 // pred_check
        %p259 = pneg %p258
      $region30: #{masked_multipathway.1} parent=5 // pred_check_branch
        %261 = sbr.rel (%p259) target = $region32
      $region31: #{masked_multipathway.1} parent=5 // pred_region
        // Predicated region
        $region33: #{masked_multipathway.1} parent=31 // pred_check
          %p262 = pneg %p37
        $region34: #{masked_multipathway.1} parent=31 // pred_check_branch
          %264 = sbr.rel (%p262) target = $region36
        $region35: #{masked_multipathway.1} parent=31 // pred_region
          %s265 = smul.u32 8, %s17
          %p266 = scmp.lt.s32.totalorder %s265, 15
          %s267 = scalar_select %p266, %s265, 15
          %s268 = smul.addr %s267, 8
          %s269 = scalar_lea.vmem %s0, %s268
          %s270 = smul.u32 8, %s17
        $region36: #{masked_multipathway.1} parent=31 // pred_fallthru
          _
        // Predicated region
        $region37: #{masked_multipathway.1} parent=31 // pred_check
          %p271 = pneg %p63
        $region38: #{masked_multipathway.1} parent=31 // pred_check_branch
          %273 = sbr.rel (%p271) target = $region40
        $region39: #{masked_multipathway.1} parent=31 // pred_region
          %p274 = scmp.lt.s32.totalorder %s17, 1
          %s275 = scalar_select %p274, %s17, 1
          %s276 = smul.addr %s275, 8
          %s277 = scalar_lea.vmem %s1, %s276
        $region40: #{masked_multipathway.1} parent=31 // pred_fallthru
          _
        // Predicated region
        $region41: #{masked_multipathway.1} parent=31 // pred_check
          %p278 = pneg %p89
        $region42: #{masked_multipathway.1} parent=31 // pred_check_branch
          %280 = sbr.rel (%p278) target = $region44
        $region43: #{masked_multipathway.1} parent=31 // pred_region
          %s281 = smul.u32 8, %s17
          %p282 = scmp.lt.s32.totalorder %s281, 15
          %s283 = scalar_select %p282, %s281, 15
          %s284 = smul.addr %s283, 8
          %s285 = scalar_lea.vmem %s2, %s284
          %s286 = smul.u32 8, %s17
        $region44: #{masked_multipathway.1} parent=31 // pred_fallthru
          _
        // Predicated region
        $region45: #{masked_multipathway.1} parent=31 // pred_check
          %p287 = pneg %p115
        $region46: #{masked_multipathway.1} parent=31 // pred_check_branch
          %289 = sbr.rel (%p287) target = $region48
        $region47: #{masked_multipathway.1} parent=31 // pred_region
          %p290 = scmp.lt.s32.totalorder %s17, 1
          %s291 = scalar_select %p290, %s17, 1
          %s292 = smul.addr %s291, 8
          %s293 = scalar_lea.vmem %s3, %s292
        $region48: #{masked_multipathway.1} parent=31 // pred_fallthru
          _
      $region32: #{masked_multipathway.1} parent=5 // pred_fallthru
        _
      %p294 = scmp.le.s32.totalorder 1, %s17
      %p295 = scmp.lt.s32.totalorder %s17, 3
      %p296 = pnand %p294, %p295
      %p297 = pneg %p296
      // Predicated region
      $region49: #{masked_multipathway.1} parent=5 // pred_check
        _
      $region50: #{masked_multipathway.1} parent=5 // pred_check_branch
        %299 = sbr.rel (%p296) target = $region52
      $region51: #{masked_multipathway.1} parent=5 // pred_region
        %s300 = ssub.s32 %s17, 1
        %s301 = smul.u32 8, %s22
        %p302 = scmp.lt.s32.totalorder %s301, 15
        %s303 = scalar_select %p302, %s301, 15
        %s304 = smul.addr %s303, 8
        %s305 = scalar_lea.vmem %s0, %s304
        %p306 = pneg %p43
        %p307 = pneg %p40
        %p308 = scmp.lt.s32.totalorder %s22, 1
        %s309 = scalar_select %p308, %s22, 1
        %s310 = smul.addr %s309, 8
        %s311 = scalar_lea.vmem %s1, %s310
        %p312 = pneg %p69
        %p313 = pneg %p66
        %s314 = smul.u32 8, %s22
        %p315 = scmp.lt.s32.totalorder %s314, 15
        %s316 = scalar_select %p315, %s314, 15
        %s317 = smul.addr %s316, 8
        %s318 = scalar_lea.vmem %s2, %s317
        %p319 = pneg %p95
        %p320 = pneg %p92
        %p321 = scmp.lt.s32.totalorder %s22, 1
        %s322 = scalar_select %p321, %s22, 1
        %s323 = smul.addr %s322, 8
        %s324 = scalar_lea.vmem %s3, %s323
        %p325 = pneg %p121
        %p326 = pneg %p118
        %p327 = pneg %p142
        %p328 = pneg %p139
        %p329 = pneg %p163
        %p330 = pneg %p160
        %p331 = pneg %p184
        %p332 = pneg %p181
        %p333 = pneg %p205
        %p334 = pneg %p202
        %p335 = pneg %p231
        %p336 = pneg %p228
        %s337 = sand.u32 %s218, 1
        %s338 = scalar_lea.sflag [#allocation3], %s337
        %s339 = sand.u32 %s218, 1
        %s340 = smul.addr %s339, 8
        %s341 = scalar_lea.vmem [#allocation2], %s340
        %s342 = smul.u32 8, %s22
        %p343 = scmp.lt.s32.totalorder %s342, 15
        %s344 = scalar_select %p343, %s342, 15
        %s345 = smul.addr %s344, 8
        %s346 = scalar_lea.vmem %s0, %s345
        %s347 = smul.u32 8, %s22
        %p348 = scmp.lt.s32.totalorder %s22, 1
        %s349 = scalar_select %p348, %s22, 1
        %s350 = smul.addr %s349, 8
        %s351 = scalar_lea.vmem %s1, %s350
        %s352 = smul.u32 8, %s22
        %p353 = scmp.lt.s32.totalorder %s352, 15
        %s354 = scalar_select %p353, %s352, 15
        %s355 = smul.addr %s354, 8
        %s356 = scalar_lea.vmem %s2, %s355
        %s357 = smul.u32 8, %s22
        %p358 = scmp.lt.s32.totalorder %s22, 1
        %s359 = scalar_select %p358, %s22, 1
        %s360 = smul.addr %s359, 8
        %s361 = scalar_lea.vmem %s3, %s360
        %v362 = vld [vmem:[%s346] sm:$0xff]
        %v363 = vld [vmem:[%s346 + $0x8] sm:$0xff]
        %v364 = vld [vmem:[%s346 + $0x10] sm:$0xff]
        %v365 = vld [vmem:[%s346 + $0x18] sm:$0xff]
        %v366 = vld [vmem:[%s346 + $0x20] sm:$0xff]
        %v367 = vld [vmem:[%s346 + $0x28] sm:$0xff]
        %v368 = vld [vmem:[%s346 + $0x30] sm:$0xff]
        %v369 = vld [vmem:[%s346 + $0x38] sm:$0xff]
        %v370 = vld [vmem:[%s351] sm:$0xff]
        %v371 = vlaneseq
        %v372 = vshrl.u32 %v371, 7
        %v373 = vsub.s32 0, %v372
        %v374 = vrot.slane %v370, %v373
        %376 = vbcast.lane.b32.xlu0 %v374, 256
        %v377 = vpop.permute.xlu0 %376
        %v378 = vlaneseq
        %v379 = vshrl.u32 %v378, 7
        %v380 = vsub.s32 1, %v379
        %v381 = vrot.slane %v370, %v380
        %383 = vbcast.lane.b32.xlu0 %v381, 256
        %v384 = vpop.permute.xlu0 %383
        %v385 = vlaneseq
        %v386 = vshrl.u32 %v385, 7
        %v387 = vsub.s32 2, %v386
        %v388 = vrot.slane %v370, %v387
        %390 = vbcast.lane.b32.xlu0 %v388, 256
        %v391 = vpop.permute.xlu0 %390
        %v392 = vlaneseq
        %v393 = vshrl.u32 %v392, 7
        %v394 = vsub.s32 3, %v393
        %v395 = vrot.slane %v370, %v394
        %397 = vbcast.lane.b32.xlu0 %v395, 256
        %v398 = vpop.permute.xlu0 %397
        %v399 = vlaneseq
        %v400 = vshrl.u32 %v399, 7
        %v401 = vsub.s32 4, %v400
        %v402 = vrot.slane %v370, %v401
        %404 = vbcast.lane.b32.xlu0 %v402, 256
        %v405 = vpop.permute.xlu0 %404
        %v406 = vlaneseq
        %v407 = vshrl.u32 %v406, 7
        %v408 = vsub.s32 5, %v407
        %v409 = vrot.slane %v370, %v408
        %411 = vbcast.lane.b32.xlu0 %v409, 256
        %v412 = vpop.permute.xlu0 %411
        %v413 = vlaneseq
        %v414 = vshrl.u32 %v413, 7
        %v415 = vsub.s32 6, %v414
        %v416 = vrot.slane %v370, %v415
        %418 = vbcast.lane.b32.xlu0 %v416, 256
        %v419 = vpop.permute.xlu0 %418
        %v420 = vlaneseq
        %v421 = vshrl.u32 %v420, 7
        %v422 = vsub.s32 7, %v421
        %v423 = vrot.slane %v370, %v422
        %425 = vbcast.lane.b32.xlu0 %v423, 256
        %v426 = vpop.permute.xlu0 %425
        %v427 = vmul.f32 %v362, %v377
        %v428 = vmul.f32 %v363, %v384
        %v429 = vmul.f32 %v364, %v391
        %v430 = vmul.f32 %v365, %v398
        %v431 = vmul.f32 %v366, %v405
        %v432 = vmul.f32 %v367, %v412
        %v433 = vmul.f32 %v368, %v419
        %v434 = vmul.f32 %v369, %v426
        %vm435 = vcmask 261120
        %v436 = vsel %vm435, %v427, 0.0
        %v437 = vrot.slane %v436, 4
        %v438 = vadd.f32 %v436, %v437
        %v439 = vrot.slane %v438, 2
        %v440 = vadd.f32 %v438, %v439
        %v441 = vrot.slane %v440, 1
        %v442 = vadd.f32 %v440, %v441
        %v443 = vsel %vm435, %v428, 0.0
        %v444 = vrot.slane %v443, 4
        %v445 = vadd.f32 %v443, %v444
        %v446 = vrot.slane %v445, 2
        %v447 = vadd.f32 %v445, %v446
        %v448 = vrot.slane %v447, 1
        %v449 = vadd.f32 %v447, %v448
        %v450 = vsel %vm435, %v429, 0.0
        %v451 = vrot.slane %v450, 4
        %v452 = vadd.f32 %v450, %v451
        %v453 = vrot.slane %v452, 2
        %v454 = vadd.f32 %v452, %v453
        %v455 = vrot.slane %v454, 1
        %v456 = vadd.f32 %v454, %v455
        %v457 = vsel %vm435, %v430, 0.0
        %v458 = vrot.slane %v457, 4
        %v459 = vadd.f32 %v457, %v458
        %v460 = vrot.slane %v459, 2
        %v461 = vadd.f32 %v459, %v460
        %v462 = vrot.slane %v461, 1
        %v463 = vadd.f32 %v461, %v462
        %v464 = vsel %vm435, %v431, 0.0
        %v465 = vrot.slane %v464, 4
        %v466 = vadd.f32 %v464, %v465
        %v467 = vrot.slane %v466, 2
        %v468 = vadd.f32 %v466, %v467
        %v469 = vrot.slane %v468, 1
        %v470 = vadd.f32 %v468, %v469
        %v471 = vsel %vm435, %v432, 0.0
        %v472 = vrot.slane %v471, 4
        %v473 = vadd.f32 %v471, %v472
        %v474 = vrot.slane %v473, 2
        %v475 = vadd.f32 %v473, %v474
        %v476 = vrot.slane %v475, 1
        %v477 = vadd.f32 %v475, %v476
        %v478 = vsel %vm435, %v433, 0.0
        %v479 = vrot.slane %v478, 4
        %v480 = vadd.f32 %v478, %v479
        %v481 = vrot.slane %v480, 2
        %v482 = vadd.f32 %v480, %v481
        %v483 = vrot.slane %v482, 1
        %v484 = vadd.f32 %v482, %v483
        %v485 = vsel %vm435, %v434, 0.0
        %v486 = vrot.slane %v485, 4
        %v487 = vadd.f32 %v485, %v486
        %v488 = vrot.slane %v487, 2
        %v489 = vadd.f32 %v487, %v488
        %v490 = vrot.slane %v489, 1
        %v491 = vadd.f32 %v489, %v490
        %vm492 = vcmask 64512
        %v493 = vsel %vm492, %v370, 0.0
        %494 = vadd.xlane.f32.xlu0 %v493
        %v495 = vpop.xlane.xlu0 %494
        %v496 = vmax.f32 %v495, 1.0
        %v497 = vrcp.pop %v496
        %v499 = vrot.slane %v497, 1
        %v500 = vrot.slane %v497, 2
        %v501 = vrot.slane %v497, 3
        %v502 = vrot.slane %v497, 4
        %v503 = vrot.slane %v497, 5
        %v504 = vrot.slane %v497, 6
        %v505 = vrot.slane %v497, 7
        %v514 = vmul.f32 %v442, %v497
        %v515 = vmul.f32 %v449, %v499
        %v516 = vmul.f32 %v456, %v500
        %v517 = vmul.f32 %v463, %v501
        %v518 = vmul.f32 %v470, %v502
        %v519 = vmul.f32 %v477, %v503
        %v520 = vmul.f32 %v484, %v504
        %v521 = vmul.f32 %v491, %v505
        %v522 = vld [vmem:[%s356] sm:$0xff]
        %v523 = vld [vmem:[%s356 + $0x8] sm:$0xff]
        %v524 = vld [vmem:[%s356 + $0x10] sm:$0xff]
        %v525 = vld [vmem:[%s356 + $0x18] sm:$0xff]
        %v526 = vld [vmem:[%s356 + $0x20] sm:$0xff]
        %v527 = vld [vmem:[%s356 + $0x28] sm:$0xff]
        %v528 = vld [vmem:[%s356 + $0x30] sm:$0xff]
        %v529 = vld [vmem:[%s356 + $0x38] sm:$0xff]
        %v530 = vld [vmem:[%s361] sm:$0xff]
        %v531 = vlaneseq
        %v532 = vshrl.u32 %v531, 7
        %v533 = vsub.s32 0, %v532
        %v534 = vrot.slane %v530, %v533
        %536 = vbcast.lane.b32.xlu0 %v534, 256
        %v537 = vpop.permute.xlu0 %536
        %v538 = vlaneseq
        %v539 = vshrl.u32 %v538, 7
        %v540 = vsub.s32 1, %v539
        %v541 = vrot.slane %v530, %v540
        %543 = vbcast.lane.b32.xlu0 %v541, 256
        %v544 = vpop.permute.xlu0 %543
        %v545 = vlaneseq
        %v546 = vshrl.u32 %v545, 7
        %v547 = vsub.s32 2, %v546
        %v548 = vrot.slane %v530, %v547
        %550 = vbcast.lane.b32.xlu0 %v548, 256
        %v551 = vpop.permute.xlu0 %550
        %v552 = vlaneseq
        %v553 = vshrl.u32 %v552, 7
        %v554 = vsub.s32 3, %v553
        %v555 = vrot.slane %v530, %v554
        %557 = vbcast.lane.b32.xlu0 %v555, 256
        %v558 = vpop.permute.xlu0 %557
        %v559 = vlaneseq
        %v560 = vshrl.u32 %v559, 7
        %v561 = vsub.s32 4, %v560
        %v562 = vrot.slane %v530, %v561
        %564 = vbcast.lane.b32.xlu0 %v562, 256
        %v565 = vpop.permute.xlu0 %564
        %v566 = vlaneseq
        %v567 = vshrl.u32 %v566, 7
        %v568 = vsub.s32 5, %v567
        %v569 = vrot.slane %v530, %v568
        %571 = vbcast.lane.b32.xlu0 %v569, 256
        %v572 = vpop.permute.xlu0 %571
        %v573 = vlaneseq
        %v574 = vshrl.u32 %v573, 7
        %v575 = vsub.s32 6, %v574
        %v576 = vrot.slane %v530, %v575
        %578 = vbcast.lane.b32.xlu0 %v576, 256
        %v579 = vpop.permute.xlu0 %578
        %v580 = vlaneseq
        %v581 = vshrl.u32 %v580, 7
        %v582 = vsub.s32 7, %v581
        %v583 = vrot.slane %v530, %v582
        %585 = vbcast.lane.b32.xlu0 %v583, 256
        %v586 = vpop.permute.xlu0 %585
        %v587 = vmul.f32 %v522, %v537
        %v588 = vmul.f32 %v523, %v544
        %v589 = vmul.f32 %v524, %v551
        %v590 = vmul.f32 %v525, %v558
        %v591 = vmul.f32 %v526, %v565
        %v592 = vmul.f32 %v527, %v572
        %v593 = vmul.f32 %v528, %v579
        %v594 = vmul.f32 %v529, %v586
        %vm595 = vcmask 392192
        %v596 = vsel %vm595, %v587, 0.0
        %v597 = vrot.slane %v596, 4
        %v598 = vadd.f32 %v596, %v597
        %v599 = vrot.slane %v598, 2
        %v600 = vadd.f32 %v598, %v599
        %v601 = vrot.slane %v600, 1
        %v602 = vadd.f32 %v600, %v601
        %v603 = vsel %vm595, %v588, 0.0
        %v604 = vrot.slane %v603, 4
        %v605 = vadd.f32 %v603, %v604
        %v606 = vrot.slane %v605, 2
        %v607 = vadd.f32 %v605, %v606
        %v608 = vrot.slane %v607, 1
        %v609 = vadd.f32 %v607, %v608
        %v610 = vsel %vm595, %v589, 0.0
        %v611 = vrot.slane %v610, 4
        %v612 = vadd.f32 %v610, %v611
        %v613 = vrot.slane %v612, 2
        %v614 = vadd.f32 %v612, %v613
        %v615 = vrot.slane %v614, 1
        %v616 = vadd.f32 %v614, %v615
        %v617 = vsel %vm595, %v590, 0.0
        %v618 = vrot.slane %v617, 4
        %v619 = vadd.f32 %v617, %v618
        %v620 = vrot.slane %v619, 2
        %v621 = vadd.f32 %v619, %v620
        %v622 = vrot.slane %v621, 1
        %v623 = vadd.f32 %v621, %v622
        %v624 = vsel %vm595, %v591, 0.0
        %v625 = vrot.slane %v624, 4
        %v626 = vadd.f32 %v624, %v625
        %v627 = vrot.slane %v626, 2
        %v628 = vadd.f32 %v626, %v627
        %v629 = vrot.slane %v628, 1
        %v630 = vadd.f32 %v628, %v629
        %v631 = vsel %vm595, %v592, 0.0
        %v632 = vrot.slane %v631, 4
        %v633 = vadd.f32 %v631, %v632
        %v634 = vrot.slane %v633, 2
        %v635 = vadd.f32 %v633, %v634
        %v636 = vrot.slane %v635, 1
        %v637 = vadd.f32 %v635, %v636
        %v638 = vsel %vm595, %v593, 0.0
        %v639 = vrot.slane %v638, 4
        %v640 = vadd.f32 %v638, %v639
        %v641 = vrot.slane %v640, 2
        %v642 = vadd.f32 %v640, %v641
        %v643 = vrot.slane %v642, 1
        %v644 = vadd.f32 %v642, %v643
        %v645 = vsel %vm595, %v594, 0.0
        %v646 = vrot.slane %v645, 4
        %v647 = vadd.f32 %v645, %v646
        %v648 = vrot.slane %v647, 2
        %v649 = vadd.f32 %v647, %v648
        %v650 = vrot.slane %v649, 1
        %v651 = vadd.f32 %v649, %v650
        %v652 = vsel %vm492, %v530, 0.0
        %653 = vadd.xlane.f32.xlu0 %v652
        %v654 = vpop.xlane.xlu0 %653
        %v655 = vmax.f32 %v654, 1.0
        %v656 = vrcp.pop %v655
        %v658 = vrot.slane %v656, 1
        %v659 = vrot.slane %v656, 2
        %v660 = vrot.slane %v656, 3
        %v661 = vrot.slane %v656, 4
        %v662 = vrot.slane %v656, 5
        %v663 = vrot.slane %v656, 6
        %v664 = vrot.slane %v656, 7
        %v673 = vmul.f32 %v602, %v656
        %v674 = vmul.f32 %v609, %v658
        %v675 = vmul.f32 %v616, %v659
        %v676 = vmul.f32 %v623, %v660
        %v677 = vmul.f32 %v630, %v661
        %v678 = vmul.f32 %v637, %v662
        %v679 = vmul.f32 %v644, %v663
        %v680 = vmul.f32 %v651, %v664
        %v681 = vld [vmem:[%s4] sm:$0xff]
        %v682 = vld [vmem:[%s4 + $0x8] sm:$0xff]
        %v683 = vld [vmem:[%s4 + $0x10] sm:$0xff]
        %v684 = vld [vmem:[%s4 + $0x18] sm:$0xff]
        %v685 = vld [vmem:[%s7] sm:$0x1]
        %v686 = vlaneseq
        %v687 = vshrl.u32 %v686, 7
        %v688 = vsub.s32 0, %v687
        %v689 = vrot.slane %v685, %v688
        %v698 = vrot.slane %v515, 7
        %vm699 = vcmask 1041409
        %v700 = vsel %vm699, %v698, %v514
        %v701 = vrot.slane %v516, 6
        %vm702 = vcmask 1042434
        %v703 = vsel %vm702, %v701, %v700
        %v704 = vrot.slane %v517, 5
        %vm705 = vcmask 1043459
        %v706 = vsel %vm705, %v704, %v703
        %v707 = vrot.slane %v518, 4
        %vm708 = vcmask 1044484
        %v709 = vsel %vm708, %v707, %v706
        %v710 = vrot.slane %v519, 3
        %vm711 = vcmask 1045509
        %v712 = vsel %vm711, %v710, %v709
        %v713 = vrot.slane %v520, 2
        %vm714 = vcmask 1046534
        %v715 = vsel %vm714, %v713, %v712
        %v716 = vrot.slane %v521, 1
        %vm717 = vcmask 1047559
        %v718 = vsel %vm717, %v716, %v715
        %v719 = vsel %vm435, %v718, 0
        %721 = vmatprep.subr.mxu0 0.0
        %722 = vmatpush1.msra.mxu0 0.0
        %723 = vmatprep.subr.mxu0 0.0
        %724 = vmatpush1.msra.mxu0 0.0
        %725 = vmatprep.subr.mxu0 0.0
        %726 = vmatpush1.msra.mxu0 0.0
        %727 = vmatprep.subr.mxu0 0.0
        %728 = vmatpush1.msra.mxu0 0.0
        %729 = vmatprep.subr.mxu0 0.0
        %730 = vmatpush1.msra.mxu0 0.0
        %731 = vmatprep.subr.mxu0 0.0
        %732 = vmatpush1.msra.mxu0 0.0
        %733 = vmatprep.subr.mxu0 0.0
        %734 = vmatpush1.msra.mxu0 0.0
        %735 = vmatprep.subr.mxu0 0.0
        %736 = vmatpush1.msra.mxu0 0.0
        %737 = vmatprep.subr.mxu0 0.0
        %738 = vmatpush1.msra.mxu0 0.0
        %739 = vmatprep.subr.mxu0 0.0
        %740 = vmatpush1.msra.mxu0 0.0
        %741 = vmatprep.subr.mxu0 0.0
        %742 = vmatpush1.msra.mxu0 0.0
        %743 = vmatprep.subr.mxu0 0.0
        %744 = vmatpush1.msra.mxu0 0.0
        %745 = vmatprep.subr.mxu0 0.0
        %746 = vmatpush1.msra.mxu0 %v684
        %747 = vmatprep.subr.mxu0 0.0
        %748 = vmatpush1.msra.mxu0 %v683
        %749 = vmatprep.subr.mxu0 0.0
        %750 = vmatpush1.msra.mxu0 %v682
        %751 = vmatprep.subr.mxu0 0.0
        %752 = vmatpush1.msra.mxu0 %v681
        %753 = vmatprep.subr.mxu0 0.0
        %754 = vmatpush2.msra.mxu0 0.0
        %755 = vmatprep.subr.mxu0 0.0
        %756 = vmatpush2.msra.mxu0 0.0
        %757 = vmatprep.subr.mxu0 0.0
        %758 = vmatpush2.msra.mxu0 0.0
        %759 = vmatprep.subr.mxu0 0.0
        %760 = vmatpush2.msra.mxu0 0.0
        %761 = vmatprep.subr.mxu0 0.0
        %762 = vmatpush2.msra.mxu0 0.0
        %763 = vmatprep.subr.mxu0 0.0
        %764 = vmatpush2.msra.mxu0 0.0
        %765 = vmatprep.subr.mxu0 0.0
        %766 = vmatpush2.msra.mxu0 0.0
        %767 = vmatprep.subr.mxu0 0.0
        %768 = vmatpush2.msra.mxu0 0.0
        %769 = vmatprep.subr.mxu0 0.0
        %770 = vmatpush2.msra.mxu0 0.0
        %771 = vmatprep.subr.mxu0 0.0
        %772 = vmatpush2.msra.mxu0 0.0
        %773 = vmatprep.subr.mxu0 0.0
        %774 = vmatpush2.msra.mxu0 0.0
        %775 = vmatprep.subr.mxu0 0.0
        %776 = vmatpush2.msra.mxu0 0.0
        %777 = vmatprep.subr.mxu0 0.0
        %778 = vmatpush2.msra.mxu0 0.0
        %779 = vmatprep.subr.mxu0 0.0
        %780 = vmatpush2.msra.mxu0 0.0
        %781 = vmatprep.subr.mxu0 0.0
        %782 = vmatpush2.msra.mxu0 0.0
        %783 = vmatprep.subr.mxu0 0.0
        %784 = vmatpush2.msra.mxu0 0.0
        %785 = vmatprep.mubr.f32.mxu0 0.0
        %786 = vmatmul.mubr.f32.gmra.mxu0 %v719
        %v787 = vpop.f32.mrf.mxu0
        %v788 = vadd.f32 %v689, %v787
        %v789 = vpop.f32.mrf.mxu0
        %790 = vdwg.mxu0
        %v791 = vmax.f32 %v788, 0.0
        %v792 = vld [vmem:[%s5] sm:$0xff]
        %v793 = vld [vmem:[%s5 + $0x8] sm:$0xff]
        %v794 = vld [vmem:[%s5 + $0x10] sm:$0xff]
        %v795 = vld [vmem:[%s5 + $0x18] sm:$0xff]
        %v796 = vld [vmem:[%s5 + $0x20] sm:$0xff]
        %v797 = vld [vmem:[%s5 + $0x28] sm:$0xff]
        %v798 = vld [vmem:[%s7 + $0x1] sm:$0x1]
        %v799 = vlaneseq
        %v800 = vshrl.u32 %v799, 7
        %v801 = vsub.s32 0, %v800
        %v802 = vrot.slane %v798, %v801
        %v811 = vrot.slane %v674, 7
        %v812 = vsel %vm699, %v811, %v673
        %v813 = vrot.slane %v675, 6
        %v814 = vsel %vm702, %v813, %v812
        %v815 = vrot.slane %v676, 5
        %v816 = vsel %vm705, %v815, %v814
        %v817 = vrot.slane %v677, 4
        %v818 = vsel %vm708, %v817, %v816
        %v819 = vrot.slane %v678, 3
        %v820 = vsel %vm711, %v819, %v818
        %v821 = vrot.slane %v679, 2
        %v822 = vsel %vm714, %v821, %v820
        %v823 = vrot.slane %v680, 1
        %v824 = vsel %vm717, %v823, %v822
        %v825 = vsel %vm595, %v824, 0
        %827 = vmatprep.subr.mxu0 0.0
        %828 = vmatpush1.msra.mxu0 0.0
        %829 = vmatprep.subr.mxu0 0.0
        %830 = vmatpush1.msra.mxu0 0.0
        %831 = vmatprep.subr.mxu0 0.0
        %832 = vmatpush1.msra.mxu0 0.0
        %833 = vmatprep.subr.mxu0 0.0
        %834 = vmatpush1.msra.mxu0 0.0
        %835 = vmatprep.subr.mxu0 0.0
        %836 = vmatpush1.msra.mxu0 0.0
        %837 = vmatprep.subr.mxu0 0.0
        %838 = vmatpush1.msra.mxu0 0.0
        %839 = vmatprep.subr.mxu0 0.0
        %840 = vmatpush1.msra.mxu0 0.0
        %841 = vmatprep.subr.mxu0 0.0
        %842 = vmatpush1.msra.mxu0 0.0
        %843 = vmatprep.subr.mxu0 0.0
        %844 = vmatpush1.msra.mxu0 0.0
        %845 = vmatprep.subr.mxu0 0.0
        %846 = vmatpush1.msra.mxu0 0.0
        %847 = vmatprep.subr.mxu0 0.0
        %848 = vmatpush1.msra.mxu0 %v797
        %849 = vmatprep.subr.mxu0 0.0
        %850 = vmatpush1.msra.mxu0 %v796
        %851 = vmatprep.subr.mxu0 0.0
        %852 = vmatpush1.msra.mxu0 %v795
        %853 = vmatprep.subr.mxu0 0.0
        %854 = vmatpush1.msra.mxu0 %v794
        %855 = vmatprep.subr.mxu0 0.0
        %856 = vmatpush1.msra.mxu0 %v793
        %857 = vmatprep.subr.mxu0 0.0
        %858 = vmatpush1.msra.mxu0 %v792
        %859 = vmatprep.subr.mxu0 0.0
        %860 = vmatpush2.msra.mxu0 0.0
        %861 = vmatprep.subr.mxu0 0.0
        %862 = vmatpush2.msra.mxu0 0.0
        %863 = vmatprep.subr.mxu0 0.0
        %864 = vmatpush2.msra.mxu0 0.0
        %865 = vmatprep.subr.mxu0 0.0
        %866 = vmatpush2.msra.mxu0 0.0
        %867 = vmatprep.subr.mxu0 0.0
        %868 = vmatpush2.msra.mxu0 0.0
        %869 = vmatprep.subr.mxu0 0.0
        %870 = vmatpush2.msra.mxu0 0.0
        %871 = vmatprep.subr.mxu0 0.0
        %872 = vmatpush2.msra.mxu0 0.0
        %873 = vmatprep.subr.mxu0 0.0
        %874 = vmatpush2.msra.mxu0 0.0
        %875 = vmatprep.subr.mxu0 0.0
        %876 = vmatpush2.msra.mxu0 0.0
        %877 = vmatprep.subr.mxu0 0.0
        %878 = vmatpush2.msra.mxu0 0.0
        %879 = vmatprep.subr.mxu0 0.0
        %880 = vmatpush2.msra.mxu0 0.0
        %881 = vmatprep.subr.mxu0 0.0
        %882 = vmatpush2.msra.mxu0 0.0
        %883 = vmatprep.subr.mxu0 0.0
        %884 = vmatpush2.msra.mxu0 0.0
        %885 = vmatprep.subr.mxu0 0.0
        %886 = vmatpush2.msra.mxu0 0.0
        %887 = vmatprep.subr.mxu0 0.0
        %888 = vmatpush2.msra.mxu0 0.0
        %889 = vmatprep.subr.mxu0 0.0
        %890 = vmatpush2.msra.mxu0 0.0
        %891 = vmatprep.mubr.f32.mxu0 0.0
        %892 = vmatmul.mubr.f32.gmra.mxu0 %v825
        %v893 = vpop.f32.mrf.mxu0
        %v894 = vadd.f32 %v802, %v893
        %v895 = vpop.f32.mrf.mxu0
        %896 = vdwg.mxu0
        %v897 = vmax.f32 %v894, 0.0
        %v898 = vld [vmem:[%s6] sm:$0xff]
        %v899 = vld [vmem:[%s6 + $0x8] sm:$0xff]
        %v900 = vld [vmem:[%s6 + $0x10] sm:$0xff]
        %v901 = vld [vmem:[%s6 + $0x18] sm:$0xff]
        %v902 = vld [vmem:[%s6 + $0x20] sm:$0xff]
        %v903 = vld [vmem:[%s6 + $0x28] sm:$0xff]
        %v904 = vld [vmem:[%s6 + $0x30] sm:$0xff]
        %v905 = vld [vmem:[%s6 + $0x38] sm:$0xff]
        %v906 = vld [vmem:[%s6 + $0x40] sm:$0xff]
        %v907 = vld [vmem:[%s6 + $0x48] sm:$0xff]
        %v908 = vld [vmem:[%s6 + $0x50] sm:$0xff]
        %v909 = vld [vmem:[%s6 + $0x58] sm:$0xff]
        %v910 = vld [vmem:[%s6 + $0x60] sm:$0xff]
        %v911 = vld [vmem:[%s6 + $0x68] sm:$0xff]
        %v912 = vld [vmem:[%s6 + $0x70] sm:$0xff]
        %v913 = vld [vmem:[%s6 + $0x78] sm:$0xff]
        %v914 = vld [vmem:[%s6 + $0x80] sm:$0xff]
        %v915 = vld [vmem:[%s6 + $0x88] sm:$0xff]
        %v916 = vld [vmem:[%s6 + $0x90] sm:$0xff]
        %v917 = vld [vmem:[%s6 + $0x98] sm:$0xff]
        %v918 = vld [vmem:[%s6 + $0xa0] sm:$0xff]
        %v919 = vld [vmem:[%s6 + $0xa8] sm:$0xff]
        %v920 = vld [vmem:[%s6 + $0xb0] sm:$0xff]
        %v921 = vld [vmem:[%s6 + $0xb8] sm:$0xff]
        %v922 = vld [vmem:[%s6 + $0xc0] sm:$0xff]
        %v923 = vld [vmem:[%s6 + $0xc8] sm:$0xff]
        %v924 = vld [vmem:[%s6 + $0xd0] sm:$0xff]
        %v925 = vld [vmem:[%s6 + $0xd8] sm:$0xff]
        %v926 = vld [vmem:[%s6 + $0xe0] sm:$0xff]
        %v927 = vld [vmem:[%s6 + $0xe8] sm:$0xff]
        %v928 = vld [vmem:[%s6 + $0xf0] sm:$0xff]
        %v929 = vld [vmem:[%s6 + $0xf8] sm:$0xff]
        %v930 = vld [vmem:[%s7 + $0x2] sm:$0x1]
        %v931 = vlaneseq
        %v932 = vshrl.u32 %v931, 7
        %v933 = vsub.s32 0, %v932
        %v934 = vrot.slane %v930, %v933
        %935 = vmatprep.subr.mxu0 0.0
        %936 = vmatpush1.msra.mxu0 %v913
        %937 = vmatprep.subr.mxu0 0.0
        %938 = vmatpush1.msra.mxu0 %v912
        %939 = vmatprep.subr.mxu0 0.0
        %940 = vmatpush1.msra.mxu0 %v911
        %941 = vmatprep.subr.mxu0 0.0
        %942 = vmatpush1.msra.mxu0 %v910
        %943 = vmatprep.subr.mxu0 0.0
        %944 = vmatpush1.msra.mxu0 %v909
        %945 = vmatprep.subr.mxu0 0.0
        %946 = vmatpush1.msra.mxu0 %v908
        %947 = vmatprep.subr.mxu0 0.0
        %948 = vmatpush1.msra.mxu0 %v907
        %949 = vmatprep.subr.mxu0 0.0
        %950 = vmatpush1.msra.mxu0 %v906
        %951 = vmatprep.subr.mxu0 0.0
        %952 = vmatpush1.msra.mxu0 %v905
        %953 = vmatprep.subr.mxu0 0.0
        %954 = vmatpush1.msra.mxu0 %v904
        %955 = vmatprep.subr.mxu0 0.0
        %956 = vmatpush1.msra.mxu0 %v903
        %957 = vmatprep.subr.mxu0 0.0
        %958 = vmatpush1.msra.mxu0 %v902
        %959 = vmatprep.subr.mxu0 0.0
        %960 = vmatpush1.msra.mxu0 %v901
        %961 = vmatprep.subr.mxu0 0.0
        %962 = vmatpush1.msra.mxu0 %v900
        %963 = vmatprep.subr.mxu0 0.0
        %964 = vmatpush1.msra.mxu0 %v899
        %965 = vmatprep.subr.mxu0 0.0
        %966 = vmatpush1.msra.mxu0 %v898
        %967 = vmatprep.subr.mxu0 0.0
        %968 = vmatpush2.msra.mxu0 %v929
        %969 = vmatprep.subr.mxu0 0.0
        %970 = vmatpush2.msra.mxu0 %v928
        %971 = vmatprep.subr.mxu0 0.0
        %972 = vmatpush2.msra.mxu0 %v927
        %973 = vmatprep.subr.mxu0 0.0
        %974 = vmatpush2.msra.mxu0 %v926
        %975 = vmatprep.subr.mxu0 0.0
        %976 = vmatpush2.msra.mxu0 %v925
        %977 = vmatprep.subr.mxu0 0.0
        %978 = vmatpush2.msra.mxu0 %v924
        %979 = vmatprep.subr.mxu0 0.0
        %980 = vmatpush2.msra.mxu0 %v923
        %981 = vmatprep.subr.mxu0 0.0
        %982 = vmatpush2.msra.mxu0 %v922
        %983 = vmatprep.subr.mxu0 0.0
        %984 = vmatpush2.msra.mxu0 %v921
        %985 = vmatprep.subr.mxu0 0.0
        %986 = vmatpush2.msra.mxu0 %v920
        %987 = vmatprep.subr.mxu0 0.0
        %988 = vmatpush2.msra.mxu0 %v919
        %989 = vmatprep.subr.mxu0 0.0
        %990 = vmatpush2.msra.mxu0 %v918
        %991 = vmatprep.subr.mxu0 0.0
        %992 = vmatpush2.msra.mxu0 %v917
        %993 = vmatprep.subr.mxu0 0.0
        %994 = vmatpush2.msra.mxu0 %v916
        %995 = vmatprep.subr.mxu0 0.0
        %996 = vmatpush2.msra.mxu0 %v915
        %997 = vmatprep.subr.mxu0 0.0
        %998 = vmatpush2.msra.mxu0 %v914
        %999 = vmatprep.mubr.f32.mxu0 %v897
        %1000 = vmatmul.mubr.f32.gmra.mxu0 %v791
        %v1001 = vpop.f32.mrf.mxu0
        %v1002 = vadd.f32 %v934, %v1001
        %v1003 = vpop.f32.mrf.mxu0
        %1004 = vdwg.mxu0
        %1005 = vst [vmem:[%s341] sm:$0xff] %v1002
        %s1006 = sand.u32 %s218, 1
        %s1007 = scalar_lea.sflag [#allocation3], %s1006
        %s1008 = sand.u32 %s218, 1
        %s1009 = smul.addr %s1008, 8
        %s1010 = scalar_lea.vmem [#allocation2], %s1009
        // Predicated region
        $region53: #{masked_multipathway.1} parent=51 // pred_check
          %p1011 = pneg %p228
        $region54: #{masked_multipathway.1} parent=51 // pred_check_branch
          %1013 = sbr.rel (%p1011) target = $region56
        $region55: #{masked_multipathway.1} parent=51 // pred_region
          %s1015 = ssub.s32 128, 128
          %1016 = vsyncadd %s1007, %s1015
          %s1017 = smul.addr %s22, 128
          %s1018 = scalar_lea.hbm %s8, %s1017
          %s1020 = sshll.u32 %s1010, 4
          %s1021 = int_to_ptr.vmem [resolvable:$true] %s1020
          %1023 = dma.vmem_to_hbm [thread:$0]  %s1021, 128, %s1018, %s1007
        $region56: #{masked_multipathway.1} parent=51 // pred_fallthru
          _
      $region52: #{masked_multipathway.1} parent=5 // pred_fallthru
        _
      %p1024 = scmp.le.s32.totalorder 2, %s17
      // Predicated region
      $region57: #{masked_multipathway.1} parent=5 // pred_check
        %p1025 = pneg %p1024
      $region58: #{masked_multipathway.1} parent=5 // pred_check_branch
        %1027 = sbr.rel (%p1025) target = $region60
      $region59: #{masked_multipathway.1} parent=5 // pred_region
        %s1028 = ssub.s32 %s17, 2
        // Predicated region
        $region61: #{masked_multipathway.1} parent=59 // pred_check
          %p1029 = pneg %p234
        $region62: #{masked_multipathway.1} parent=59 // pred_check_branch
          %1031 = sbr.rel (%p1029) target = $region64
        $region63: #{masked_multipathway.1} parent=59 // pred_region
          %s1032 = sand.u32 %s219, 1
          %s1033 = scalar_lea.sflag [#allocation3], %s1032
          %s1034 = sand.u32 %s219, 1
          %s1035 = smul.addr %s1034, 8
          %s1036 = scalar_lea.vmem [#allocation2], %s1035
          %1037 = dma.done %s1033, 128
        $region64: #{masked_multipathway.1} parent=59 // pred_fallthru
          _
      $region60: #{masked_multipathway.1} parent=5 // pred_fallthru
        _
    $region6: #{masked_multipathway.1} parent=1 // loop_footer
      %s21 = sadd.s32 1, %s17
    $region7: #{masked_multipathway.1} parent=1 // loop_footer_branch
      %16 = sbr.rel target = $region3
    $region8: #{masked_multipathway.1} parent=1 // loop_exit
      _
    %1038 = vsyncpa [#allocation3], 1
    %s1039 = scalar_lea.sflag [#allocation3], 1
    %1040 = vsyncpa %s1039, 1

</llo_original>
